<compile_context>
chip_gen: v7x
topology: tpu7x:2x2x1
jax: 0.10.0
libtpu: 0.0.40
codegen_flags: <defaults>
</compile_context>

<pallas_src>
import functools

import jax
import jax.numpy as jnp
from jax.experimental import pallas as pl
from jax.experimental.pallas import tpu as pltpu


def _pair(v):
    return tuple(v) if isinstance(v, (tuple, list)) else (v, v)


def _quadruple(v):
    return tuple(v) if isinstance(v, (tuple, list)) else (v,) * 4


def _median3x3_kernel(x_ref, o_ref, *, ho, wd, compute_dtype):
    """3x3 lower median, stride-1 dense, shared column sorts.

    x_ref: (tc, Hp, Wpad)   o_ref: (tc, Hp-2, Wpad); valid output cols [0, wd).
    """
    x = x_ref[...].astype(compute_dtype)

    # ---- shared vertical 3-sorts over rows (6 min/max ops, reused by the 3
    # horizontally adjacent windows that touch each column).
    r0 = x[:, 0:ho, :]
    r1 = x[:, 1:ho + 1, :]
    r2 = x[:, 2:ho + 2, :]
    mn01 = jnp.minimum(r0, r1)
    mx01 = jnp.maximum(r0, r1)
    cmin = jnp.minimum(mn01, r2)                     # per-column minimum
    cmax = jnp.maximum(mx01, r2)                     # per-column maximum
    cmed = jnp.maximum(mn01, jnp.minimum(mx01, r2))  # per-column median

    def sh(a, dj):  # window column dj (static lane-offset slice -> XLU rotate)
        return a[:, :, dj:dj + wd]

    # ---- exact median of 9 = med3(max of mins, med3 of medians, min of maxes)
    a = jnp.maximum(jnp.maximum(sh(cmin, 0), sh(cmin, 1)), sh(cmin, 2))
    c = jnp.minimum(jnp.minimum(sh(cmax, 0), sh(cmax, 1)), sh(cmax, 2))
    m1, m2, m3 = sh(cmed, 0), sh(cmed, 1), sh(cmed, 2)
    mn12 = jnp.minimum(m1, m2)
    mx12 = jnp.maximum(m1, m2)
    b = jnp.maximum(mn12, jnp.minimum(mx12, m3))     # med3 of column medians

    mnac = jnp.minimum(a, c)
    mxac = jnp.maximum(a, c)
    med = jnp.maximum(mnac, jnp.minimum(mxac, b))    # med3(a, b, c)

    o_ref[:, :, :wd] = med.astype(o_ref.dtype)


def _median_generic_kernel(x_ref, o_ref, *, kh, kw, ho, wd, compute_dtype):
    """General kh x kw lower median (odd-even transposition network), stride-1 dense."""
    x = x_ref[...].astype(compute_dtype)
    taps = []
    for di in range(kh):
        row = x[:, di:di + ho, :]
        for dj in range(kw):
            taps.append(row[:, :, dj:dj + wd])
    n = len(taps)
    for rnd in range(n):
        for j in range(rnd & 1, n - 1, 2):
            lo = jnp.minimum(taps[j], taps[j + 1])
            hi = jnp.maximum(taps[j], taps[j + 1])
            taps[j], taps[j + 1] = lo, hi
    # torch.median semantics: lower median -> sorted[(n-1)//2]
    o_ref[:, :, :wd] = taps[(n - 1) // 2].astype(o_ref.dtype)


def median_pool_2d(x, kernel_size=3, stride=1, padding=0, same=False,
                   compute_dtype=None):
    """Pallas implementation of MedianPool2d.forward (NCHW)."""
    kh, kw = _pair(kernel_size)
    sh, sw = _pair(stride)

    if same:
        ih, iw = x.shape[2], x.shape[3]
        ph = max(kh - sh, 0) if ih % sh == 0 else max(kh - ih % sh, 0)
        pw = max(kw - sw, 0) if iw % sw == 0 else max(kw - iw % sw, 0)
        pad_l, pad_r = pw // 2, pw - pw // 2
        pad_t, pad_b = ph // 2, ph - ph // 2
    else:
        pad_l, pad_r, pad_t, pad_b = _quadruple(padding)

    if pad_l or pad_r or pad_t or pad_b:
        x = jnp.pad(x, ((0, 0), (0, 0), (pad_t, pad_b), (pad_l, pad_r)),
                    mode="reflect")

    N, C, Hp, Wp = x.shape
    ho = (Hp - kh) // sh + 1
    wo = (Wp - kw) // sw + 1
    ho_dense = Hp - kh + 1          # kernel computes stride-1 dense results;
                                    # the wrapper subsamples for stride > 1.

    if compute_dtype is None:
        # On v6e/v7x bf16 inputs stay bf16 (2x vreg density).
        # TODO(synk): on v5e (no bf16 VPU) pass compute_dtype=jnp.float32 for bf16 inputs.
        compute_dtype = x.dtype

    # ---- lane-dense layout: (N*C, Hp, Wpad), W on the 128-lane axis.
    nc = N * C
    x3 = x.reshape(nc, Hp, Wp)
    w_pad = max(128, -(-Wp // 128) * 128)
    if w_pad != Wp:
        x3 = jnp.pad(x3, ((0, 0), (0, 0), (0, w_pad - Wp)))
    wd = w_pad - kw + 1             # valid dense-output columns live in [0, wd)

    # ---- channel tiling: keep the per-step input block around <=1 MiB so the
    # ~10x live working set (sorted-column arrays + double buffers) fits scoped
    # VMEM on every generation (v7x: 64 MiB physical / 32 MiB scoped default).
    itemsize = jnp.dtype(x.dtype).itemsize
    per_chan = Hp * w_pad * itemsize
    tc_cap = max(1, (1 << 20) // per_chan)
    if nc >= 2:
        # keep >=2 grid steps so the "parallel" axis can shard across v7x's 2 TCs.
        tc_cap = min(tc_cap, max(1, nc // 2))
    tc = max(d for d in range(1, min(tc_cap, nc) + 1) if nc % d == 0)
    grid = (nc // tc,)

    if (kh, kw) == (3, 3):
        kern = functools.partial(_median3x3_kernel, ho=ho_dense, wd=wd,
                                 compute_dtype=compute_dtype)
        ops_per_out = 18
    else:
        kern = functools.partial(_median_generic_kernel, kh=kh, kw=kw,
                                 ho=ho_dense, wd=wd, compute_dtype=compute_dtype)
        ops_per_out = kh * kw * kh * kw

    in_bytes = nc * Hp * w_pad * itemsize
    out_bytes = nc * ho_dense * w_pad * itemsize
    cost = pl.CostEstimate(flops=ops_per_out * nc * ho_dense * w_pad,
                           transcendentals=0,
                           bytes_accessed=in_bytes + out_bytes)

    out_full = pl.pallas_call(
        kern,
        out_shape=jax.ShapeDtypeStruct((nc, ho_dense, w_pad), x.dtype),
        grid=grid,
        in_specs=[pl.BlockSpec((tc, Hp, w_pad), lambda i: (i, 0, 0))],
        out_specs=pl.BlockSpec((tc, ho_dense, w_pad), lambda i: (i, 0, 0)),
        compiler_params=pltpu.CompilerParams(
            dimension_semantics=("parallel",)),
        cost_estimate=cost,
    )(x3)

    # Crop lane padding / horizontal halo and subsample for stride > 1.
    out = out_full[:, :(ho - 1) * sh + 1:sh, :(wo - 1) * sw + 1:sw]
    return out.reshape(N, C, ho, wo)


def _median_pool_ref(x, kernel_size=3, stride=1, padding=0, same=False):
    """Pure-JAX reference (unfold + sort) for correctness checking."""
    kh, kw = _pair(kernel_size)
    sh, sw = _pair(stride)
    if same:
        ih, iw = x.shape[2], x.shape[3]
        ph = max(kh - sh, 0) if ih % sh == 0 else max(kh - ih % sh, 0)
        pw = max(kw - sw, 0) if iw % sw == 0 else max(kw - iw % sw, 0)
        pad = ((0, 0), (0, 0), (ph // 2, ph - ph // 2), (pw // 2, pw - pw // 2))
    else:
        pad_l, pad_r, pad_t, pad_b = _quadruple(padding)
        pad = ((0, 0), (0, 0), (pad_t, pad_b), (pad_l, pad_r))
    if any(p != (0, 0) for p in pad):
        x = jnp.pad(x, pad, mode="reflect")
    N, C, Hp, Wp = x.shape
    ho = (Hp - kh) // sh + 1
    wo = (Wp - kw) // sw + 1
    taps = []
    for di in range(kh):
        for dj in range(kw):
            taps.append(x[:, :,
                          di:di + (ho - 1) * sh + 1:sh,
                          dj:dj + (wo - 1) * sw + 1:sw])
    stacked = jnp.stack(taps, axis=-1)
    srt = jnp.sort(stacked, axis=-1)
    return srt[..., (kh * kw - 1) // 2]


if __name__ == "__main__":
    key = jax.random.PRNGKey(0)
    x = jax.random.normal(key, (2, 4, 16, 16), dtype=jnp.float32)

    # default config (matches the module defaults / test shape)
    out = median_pool_2d(x, kernel_size=3, stride=1, padding=0, same=False)
    out = jax.block_until_ready(out)
    ref = _median_pool_ref(x, 3, 1, 0, False)
    assert out.shape == (2, 4, 14, 14), out.shape
    assert jnp.array_equal(out, ref), "mismatch vs reference (k=3, no pad)"

    # 'same' padding path (exercises reflect padding)
    out_s = jax.block_until_ready(median_pool_2d(x, 3, 1, 0, same=True))
    ref_s = _median_pool_ref(x, 3, 1, 0, same=True)
    assert out_s.shape == (2, 4, 16, 16), out_s.shape
    assert jnp.array_equal(out_s, ref_s), "mismatch vs reference (same=True)"

    print("KERNEL_OK")
</pallas_src>

<mosaic_0001>
module attributes {stable_mosaic.version = 11 : i64} {
  func.func @_median3x3_kernel(%arg0: i32, %arg1: memref<4x16x128xf32, #tpu.memory_space<vmem>>, %arg2: memref<4x14x128xf32, #tpu.memory_space<vmem>>) attributes {dimension_semantics = [#tpu.dimension_semantics<parallel>], iteration_bounds = array<i64: 2>, scalar_prefetch = 0 : i64, scratch_operands = 0 : i64, tpu.core_type = #tpu.core_type<tc>, window_params = [{transform_indices = @transform_0, window_bounds = array<i64: 4, 16, 128>}, {transform_indices = @transform_1, window_bounds = array<i64: 4, 14, 128>}]} {
    %c0 = arith.constant 0 : index
    %c0_0 = arith.constant 0 : index
    %c0_1 = arith.constant 0 : index
    %0 = vector.load %arg1[%c0, %c0_0, %c0_1] : memref<4x16x128xf32, #tpu.memory_space<vmem>>, vector<4x16x128xf32>
    %1 = vector.extract_strided_slice %0 {offsets = [0, 0, 0], sizes = [4, 14, 128], strides = [1, 1, 1]} : vector<4x16x128xf32> to vector<4x14x128xf32>
    %2 = vector.extract_strided_slice %0 {offsets = [0, 1, 0], sizes = [4, 14, 128], strides = [1, 1, 1]} : vector<4x16x128xf32> to vector<4x14x128xf32>
    %3 = vector.extract_strided_slice %0 {offsets = [0, 2, 0], sizes = [4, 14, 128], strides = [1, 1, 1]} : vector<4x16x128xf32> to vector<4x14x128xf32>
    %4 = arith.minimumf %1, %2 : vector<4x14x128xf32>
    %5 = arith.maximumf %1, %2 : vector<4x14x128xf32>
    %6 = arith.minimumf %4, %3 : vector<4x14x128xf32>
    %7 = arith.maximumf %5, %3 : vector<4x14x128xf32>
    %8 = arith.minimumf %5, %3 : vector<4x14x128xf32>
    %9 = arith.maximumf %4, %8 : vector<4x14x128xf32>
    %10 = vector.extract_strided_slice %6 {offsets = [0, 0, 0], sizes = [4, 14, 126], strides = [1, 1, 1]} : vector<4x14x128xf32> to vector<4x14x126xf32>
    %11 = vector.extract_strided_slice %6 {offsets = [0, 0, 1], sizes = [4, 14, 126], strides = [1, 1, 1]} : vector<4x14x128xf32> to vector<4x14x126xf32>
    %12 = arith.maximumf %10, %11 : vector<4x14x126xf32>
    %13 = vector.extract_strided_slice %6 {offsets = [0, 0, 2], sizes = [4, 14, 126], strides = [1, 1, 1]} : vector<4x14x128xf32> to vector<4x14x126xf32>
    %14 = arith.maximumf %12, %13 : vector<4x14x126xf32>
    %15 = vector.extract_strided_slice %7 {offsets = [0, 0, 0], sizes = [4, 14, 126], strides = [1, 1, 1]} : vector<4x14x128xf32> to vector<4x14x126xf32>
    %16 = vector.extract_strided_slice %7 {offsets = [0, 0, 1], sizes = [4, 14, 126], strides = [1, 1, 1]} : vector<4x14x128xf32> to vector<4x14x126xf32>
    %17 = arith.minimumf %15, %16 : vector<4x14x126xf32>
    %18 = vector.extract_strided_slice %7 {offsets = [0, 0, 2], sizes = [4, 14, 126], strides = [1, 1, 1]} : vector<4x14x128xf32> to vector<4x14x126xf32>
    %19 = arith.minimumf %17, %18 : vector<4x14x126xf32>
    %20 = vector.extract_strided_slice %9 {offsets = [0, 0, 0], sizes = [4, 14, 126], strides = [1, 1, 1]} : vector<4x14x128xf32> to vector<4x14x126xf32>
    %21 = vector.extract_strided_slice %9 {offsets = [0, 0, 1], sizes = [4, 14, 126], strides = [1, 1, 1]} : vector<4x14x128xf32> to vector<4x14x126xf32>
    %22 = vector.extract_strided_slice %9 {offsets = [0, 0, 2], sizes = [4, 14, 126], strides = [1, 1, 1]} : vector<4x14x128xf32> to vector<4x14x126xf32>
    %23 = arith.minimumf %20, %21 : vector<4x14x126xf32>
    %24 = arith.maximumf %20, %21 : vector<4x14x126xf32>
    %25 = arith.minimumf %24, %22 : vector<4x14x126xf32>
    %26 = arith.maximumf %23, %25 : vector<4x14x126xf32>
    %27 = arith.minimumf %14, %19 : vector<4x14x126xf32>
    %28 = arith.maximumf %14, %19 : vector<4x14x126xf32>
    %29 = arith.minimumf %28, %26 : vector<4x14x126xf32>
    %30 = arith.maximumf %27, %29 : vector<4x14x126xf32>
    %c0_2 = arith.constant 0 : index
    %c0_3 = arith.constant 0 : index
    %c0_4 = arith.constant 0 : index
    %31 = vector.load %arg2[%c0_2, %c0_3, %c0_4] : memref<4x14x128xf32, #tpu.memory_space<vmem>>, vector<4x14x126xf32>
    tpu.vector_store %arg2[%c0_2, %c0_3, %c0_4], %30 {strides = array<i32>} : memref<4x14x128xf32, #tpu.memory_space<vmem>>, vector<4x14x126xf32>,
    return
  }
  func.func @transform_0(%arg0: i32) -> (i32, i32, i32) {
    %c0_i32 = arith.constant 0 : i32
    %c0_i32_0 = arith.constant 0 : i32
    %c0_i32_1 = arith.constant 0 : i32
    return %arg0, %c0_i32, %c0_i32_0 : i32, i32, i32
  }
  func.func @transform_1(%arg0: i32) -> (i32, i32, i32) {
    %c0_i32 = arith.constant 0 : i32
    %c0_i32_0 = arith.constant 0 : i32
    %c0_i32_1 = arith.constant 0 : i32
    return %arg0, %c0_i32, %c0_i32_0 : i32, i32, i32
  }
}

</mosaic_0001>

<llo_original>
// kernel: tpu_custom_call.1
$region0: #{tpu_custom_call.1}
  #allocation0 [shape = 'u32[]', space=smem, size = 0x4, offset = 0x4, fixed_abs, tag = 'smem constant byte address 0x4 - core index']
  #allocation1 [shape = 'u32[144,128]{1,0:T(1,128)}', space=vmem, size = 0x12000, scoped, tag = 'internal scratch']
  %s0 = inlined_call_operand.hbm [shape: f32[8,16,128], index: 0, kind: input, shape index: {}]
  %s1 = inlined_call_operand.vmem [shape: f32[8,14,128], index: 1, kind: output, shape index: {}]
  %s2 = sld [smem:[#allocation0]]
  $region41: #{tpu_custom_call.1} parent=0
    _
  %s4 = ssub.s32 1, %s2
  %s5 = scalar_select 0, %s4, %s2
  $region1: #{tpu_custom_call.1} parent=0
    #allocation2 [shape = 'u8[65536]{0}', space=vmem, size = 0x10000, scoped, tag = 'input window, operand 0']
    #allocation3 [shape = 's32[2]{0}', space=sflag, size = 0x8, scoped, tag = 'scoped memory for tpu_custom_call.1']
    %6 = vsyncpa [#allocation3], 0
    %s7 = scalar_lea.sflag [#allocation3], 1
    %8 = vsyncpa %s7, 0
    loop: start=0, step=1, limit=4
    $region2: #{tpu_custom_call.1} parent=1 // loop_pre_header
      _
    $region3: #{tpu_custom_call.1} parent=1 // loop_header
      %s10 = sphi 0, %s14
      %p11 = scmp.ge.s32.totalorder %s10, 4
      %s20 = sphi 0, %s22
      %s23 = sphi 0, %s20
      %s24 = sphi 0, %s23
      %s40 = sphi 0, %s24
      %s46 = sphi 0, %s48
      %s49 = sphi 0, %s46
      %s50 = sphi 0, %s49
      %s66 = sphi 0, %s50
    $region4: #{tpu_custom_call.1} parent=1 // loop_header_branch
      %13 = sbr.rel (%p11) target = $region8
    $region5: #{tpu_custom_call.1} parent=1 // loop_body
      %s15 = ssub.s32 %s10, 1
      %s16 = ssub.s32 %s10, 2
      %s17 = sadd.s32 %s10, 1
      %s18 = ssub.s32 %s10, %s17
      %p19 = scmp.eq.s32.totalorder %s18, 0
      %s21 = sadd.s32 %s20, 1
      %s22 = scalar_select %p19, %s20, %s21
      %p25 = pneg %p19
      %p26 = scmp.eq.s32.totalorder %s10, 1
      %p27 = por %p25, %p26
      %p28 = scmp.ne.s32.totalorder %s20, %s23
      %p29 = scmp.eq.s32.totalorder %s10, 0
      %p30 = por %p28, %p29
      %p31 = scmp.ne.s32.totalorder %s20, %s23
      %p32 = scmp.eq.s32.totalorder %s15, 1
      %p33 = por %p31, %p32
      %p34 = scmp.ne.s32.totalorder %s23, %s24
      %p35 = scmp.eq.s32.totalorder %s15, 0
      %p36 = por %p34, %p35
      %p37 = scmp.ne.s32.totalorder %s23, %s24
      %p38 = scmp.eq.s32.totalorder %s16, 1
      %p39 = por %p37, %p38
      %p41 = scmp.ne.s32.totalorder %s24, %s40
      %p42 = scmp.eq.s32.totalorder %s16, 0
      %p43 = por %p41, %p42
      %s44 = ssub.s32 %s10, %s17
      %p45 = scmp.eq.s32.totalorder %s44, 0
      %s47 = sadd.s32 %s46, 1
      %s48 = scalar_select %p45, %s46, %s47
      %p51 = pneg %p45
      %p52 = scmp.eq.s32.totalorder %s10, 1
      %p53 = por %p51, %p52
      %p54 = scmp.ne.s32.totalorder %s46, %s49
      %p55 = scmp.eq.s32.totalorder %s10, 0
      %p56 = por %p54, %p55
      %p57 = scmp.ne.s32.totalorder %s46, %s49
      %p58 = scmp.eq.s32.totalorder %s15, 1
      %p59 = por %p57, %p58
      %p60 = scmp.ne.s32.totalorder %s49, %s50
      %p61 = scmp.eq.s32.totalorder %s15, 0
      %p62 = por %p60, %p61
      %p63 = scmp.ne.s32.totalorder %s49, %s50
      %p64 = scmp.eq.s32.totalorder %s16, 1
      %p65 = por %p63, %p64
      %p67 = scmp.ne.s32.totalorder %s50, %s66
      %p68 = scmp.eq.s32.totalorder %s16, 0
      %p69 = por %p67, %p68
      %p70 = scmp.le.s32.totalorder 1, %s10
      %p71 = scmp.lt.s32.totalorder %s10, 3
      %p72 = pnand %p70, %p71
      %p73 = pneg %p72
      // Predicated region
      $region9: #{tpu_custom_call.1} parent=5 // pred_check
        _
      $region10: #{tpu_custom_call.1} parent=5 // pred_check_branch
        %75 = sbr.rel (%p72) target = $region12
      $region11: #{tpu_custom_call.1} parent=5 // pred_region
        %s76 = ssub.s32 %s10, 1
      $region12: #{tpu_custom_call.1} parent=5 // pred_fallthru
        _
      %p77 = scmp.lt.s32.totalorder %s10, 2
      // Predicated region
      $region13: #{tpu_custom_call.1} parent=5 // pred_check
        %p78 = pneg %p77
      $region14: #{tpu_custom_call.1} parent=5 // pred_check_branch
        %80 = sbr.rel (%p78) target = $region16
      $region15: #{tpu_custom_call.1} parent=5 // pred_region
        // Predicated region
        $region17: #{tpu_custom_call.1} parent=15 // pred_check
          %p81 = pneg %p30
        $region18: #{tpu_custom_call.1} parent=15 // pred_check_branch
          %83 = sbr.rel (%p81) target = $region20
        $region19: #{tpu_custom_call.1} parent=15 // pred_region
          %s84 = sand.u32 %s20, 1
          %s85 = scalar_lea.sflag [#allocation3], %s84
          %s86 = sand.u32 %s20, 1
          %s87 = smul.addr %s86, 64
          %s88 = scalar_lea.vmem [#allocation2], %s87
          %s89 = smul.u32 4, %s10
          %s91 = ssub.s32 1024, 1024
          %92 = vsyncadd %s85, %s91
          %s93 = smul.addr %s89, 2
          %s94 = smul.addr %s93, 128
          %s95 = scalar_lea.hbm %s0, %s94
          %s96 = sshll.u32 %s88, 4
          %s97 = int_to_ptr.vmem [resolvable:$true] %s96
          %102 = dma.hbm_to_vmem [thread:$0]  %s95, 1024, %s97, %s85, 128, 128, 8
        $region20: #{tpu_custom_call.1} parent=15 // pred_fallthru
          _
      $region16: #{tpu_custom_call.1} parent=5 // pred_fallthru
        _
      %p103 = scmp.le.s32.totalorder 1, %s10
      %p104 = scmp.lt.s32.totalorder %s10, 3
      %p105 = pnand %p103, %p104
      %p106 = pneg %p105
      // Predicated region
      $region21: #{tpu_custom_call.1} parent=5 // pred_check
        _
      $region22: #{tpu_custom_call.1} parent=5 // pred_check_branch
        %108 = sbr.rel (%p105) target = $region24
      $region23: #{tpu_custom_call.1} parent=5 // pred_region
        %s109 = ssub.s32 %s10, 1
        %s110 = sand.u32 %s23, 1
        %s111 = scalar_lea.sflag [#allocation3], %s110
        %s112 = sand.u32 %s23, 1
        %s113 = smul.addr %s112, 64
        %s114 = scalar_lea.vmem [#allocation2], %s113
        // Predicated region
        $region25: #{tpu_custom_call.1} parent=23 // pred_check
          %p115 = pneg %p36
        $region26: #{tpu_custom_call.1} parent=23 // pred_check_branch
          %117 = sbr.rel (%p115) target = $region28
        $region27: #{tpu_custom_call.1} parent=23 // pred_region
          %118 = dma.done %s111, 1024
        $region28: #{tpu_custom_call.1} parent=23 // pred_fallthru
          _
        %s119 = sand.u32 %s23, 1
        %s120 = scalar_lea.sflag [#allocation3], %s119
        %s121 = sand.u32 %s23, 1
        %s122 = smul.addr %s121, 64
        %s123 = scalar_lea.vmem [#allocation2], %s122
        %p124 = pneg %p36
        %p125 = pneg %p33
        %p126 = pneg %p62
        %p127 = pneg %p59
        %s128 = smul.u32 4, %s15
        %p129 = scmp.lt.s32.totalorder %s128, 7
        %s130 = scalar_select %p129, %s128, 7
        %s131 = smul.addr %s130, 2
        %s132 = smul.addr %s131, 8
        %s133 = scalar_lea.vmem %s1, %s132
        %s134 = smul.u32 4, %s15
        %s135 = smul.u32 4, %s15
        %p136 = scmp.lt.s32.totalorder %s135, 7
        %s137 = scalar_select %p136, %s135, 7
        %s138 = smul.addr %s137, 2
        %s139 = smul.addr %s138, 8
        %s140 = scalar_lea.vmem %s1, %s139
        %s141 = smul.u32 4, %s15
        %v142 = vld [vmem:[%s114] sm:$0xff]
        %v143 = vld [vmem:[%s114 + $0x8] sm:$0xff]
        %v144 = vld [vmem:[%s114 + $0x10] sm:$0xff]
        %v145 = vld [vmem:[%s114 + $0x18] sm:$0xff]
        %v146 = vld [vmem:[%s114 + $0x20] sm:$0xff]
        %v147 = vld [vmem:[%s114 + $0x28] sm:$0xff]
        %v148 = vld [vmem:[%s114 + $0x30] sm:$0xff]
        %v149 = vld [vmem:[%s114 + $0x38] sm:$0xff]
        %vm158 = vcmask 1046528
        %v159 = vrot.slane %v142, 1
        %v160 = vrot.slane %v143, 1
        %v161 = vsel %vm158, %v159, %v160
        %v162 = vrot.slane %v144, 1
        %v163 = vrot.slane %v145, 1
        %v164 = vsel %vm158, %v162, %v163
        %v165 = vrot.slane %v146, 1
        %v166 = vrot.slane %v147, 1
        %v167 = vsel %vm158, %v165, %v166
        %v168 = vrot.slane %v148, 1
        %v169 = vrot.slane %v149, 1
        %v170 = vsel %vm158, %v168, %v169
        %v179 = vmin.f32 %v142, %v161
        %v180 = vmin.f32 %v143, %v160
        %v181 = vmin.f32 %v144, %v164
        %v182 = vmin.f32 %v145, %v163
        %v183 = vmin.f32 %v146, %v167
        %v184 = vmin.f32 %v147, %v166
        %v185 = vmin.f32 %v148, %v170
        %v186 = vmin.f32 %v149, %v169
        %v187 = vmax.f32 %v142, %v161
        %v188 = vmax.f32 %v143, %v160
        %v189 = vmax.f32 %v144, %v164
        %v190 = vmax.f32 %v145, %v163
        %v191 = vmax.f32 %v146, %v167
        %v192 = vmax.f32 %v147, %v166
        %v193 = vmax.f32 %v148, %v170
        %v194 = vmax.f32 %v149, %v169
        %vm195 = vcmask 1045504
        %v196 = vrot.slane %v142, 2
        %v197 = vrot.slane %v143, 2
        %v198 = vsel %vm195, %v196, %v197
        %v199 = vrot.slane %v144, 2
        %v200 = vrot.slane %v145, 2
        %v201 = vsel %vm195, %v199, %v200
        %v202 = vrot.slane %v146, 2
        %v203 = vrot.slane %v147, 2
        %v204 = vsel %vm195, %v202, %v203
        %v205 = vrot.slane %v148, 2
        %v206 = vrot.slane %v149, 2
        %v207 = vsel %vm195, %v205, %v206
        %v216 = vmin.f32 %v179, %v198
        %v217 = vmin.f32 %v180, %v197
        %v218 = vmin.f32 %v181, %v201
        %v219 = vmin.f32 %v182, %v200
        %v220 = vmin.f32 %v183, %v204
        %v221 = vmin.f32 %v184, %v203
        %v222 = vmin.f32 %v185, %v207
        %v223 = vmin.f32 %v186, %v206
        %v224 = vmax.f32 %v187, %v198
        %v225 = vmax.f32 %v188, %v197
        %v226 = vmax.f32 %v189, %v201
        %v227 = vmax.f32 %v190, %v200
        %v228 = vmax.f32 %v191, %v204
        %v229 = vmax.f32 %v192, %v203
        %v230 = vmax.f32 %v193, %v207
        %v231 = vmax.f32 %v194, %v206
        %v232 = vmin.f32 %v187, %v198
        %v233 = vmin.f32 %v188, %v197
        %v234 = vmin.f32 %v189, %v201
        %v235 = vmin.f32 %v190, %v200
        %v236 = vmin.f32 %v191, %v204
        %v237 = vmin.f32 %v192, %v203
        %v238 = vmin.f32 %v193, %v207
        %v239 = vmin.f32 %v194, %v206
        %v240 = vmax.f32 %v179, %v232
        %v241 = vmax.f32 %v180, %v233
        %v242 = vmax.f32 %v181, %v234
        %v243 = vmax.f32 %v182, %v235
        %v244 = vmax.f32 %v183, %v236
        %v245 = vmax.f32 %v184, %v237
        %v246 = vmax.f32 %v185, %v238
        %v247 = vmax.f32 %v186, %v239
        %256 = vrot.lane.b32.xlu0 %v216, 127
        %v257 = vpop.permute.xlu0 %256
        %258 = vrot.lane.b32.xlu0 %v217, 127
        %v259 = vpop.permute.xlu0 %258
        %260 = vrot.lane.b32.xlu0 %v218, 127
        %v261 = vpop.permute.xlu0 %260
        %262 = vrot.lane.b32.xlu0 %v219, 127
        %v263 = vpop.permute.xlu0 %262
        %264 = vrot.lane.b32.xlu0 %v220, 127
        %v265 = vpop.permute.xlu0 %264
        %266 = vrot.lane.b32.xlu0 %v221, 127
        %v267 = vpop.permute.xlu0 %266
        %268 = vrot.lane.b32.xlu0 %v222, 127
        %v269 = vpop.permute.xlu0 %268
        %270 = vrot.lane.b32.xlu0 %v223, 127
        %v271 = vpop.permute.xlu0 %270
        %v280 = vmax.f32 %v216, %v257
        %v281 = vmax.f32 %v217, %v259
        %v282 = vmax.f32 %v218, %v261
        %v283 = vmax.f32 %v219, %v263
        %v284 = vmax.f32 %v220, %v265
        %v285 = vmax.f32 %v221, %v267
        %v286 = vmax.f32 %v222, %v269
        %v287 = vmax.f32 %v223, %v271
        %288 = vrot.lane.b32.xlu0 %v216, 126
        %v289 = vpop.permute.xlu0 %288
        %290 = vrot.lane.b32.xlu0 %v217, 126
        %v291 = vpop.permute.xlu0 %290
        %292 = vrot.lane.b32.xlu0 %v218, 126
        %v293 = vpop.permute.xlu0 %292
        %294 = vrot.lane.b32.xlu0 %v219, 126
        %v295 = vpop.permute.xlu0 %294
        %296 = vrot.lane.b32.xlu0 %v220, 126
        %v297 = vpop.permute.xlu0 %296
        %298 = vrot.lane.b32.xlu0 %v221, 126
        %v299 = vpop.permute.xlu0 %298
        %300 = vrot.lane.b32.xlu0 %v222, 126
        %v301 = vpop.permute.xlu0 %300
        %302 = vrot.lane.b32.xlu0 %v223, 126
        %v303 = vpop.permute.xlu0 %302
        %v312 = vmax.f32 %v280, %v289
        %v313 = vmax.f32 %v281, %v291
        %v314 = vmax.f32 %v282, %v293
        %v315 = vmax.f32 %v283, %v295
        %v316 = vmax.f32 %v284, %v297
        %v317 = vmax.f32 %v285, %v299
        %v318 = vmax.f32 %v286, %v301
        %v319 = vmax.f32 %v287, %v303
        %328 = vrot.lane.b32.xlu0 %v224, 127
        %v329 = vpop.permute.xlu0 %328
        %330 = vrot.lane.b32.xlu0 %v225, 127
        %v331 = vpop.permute.xlu0 %330
        %332 = vrot.lane.b32.xlu0 %v226, 127
        %v333 = vpop.permute.xlu0 %332
        %334 = vrot.lane.b32.xlu0 %v227, 127
        %v335 = vpop.permute.xlu0 %334
        %336 = vrot.lane.b32.xlu0 %v228, 127
        %v337 = vpop.permute.xlu0 %336
        %338 = vrot.lane.b32.xlu0 %v229, 127
        %v339 = vpop.permute.xlu0 %338
        %340 = vrot.lane.b32.xlu0 %v230, 127
        %v341 = vpop.permute.xlu0 %340
        %342 = vrot.lane.b32.xlu0 %v231, 127
        %v343 = vpop.permute.xlu0 %342
        %v352 = vmin.f32 %v224, %v329
        %v353 = vmin.f32 %v225, %v331
        %v354 = vmin.f32 %v226, %v333
        %v355 = vmin.f32 %v227, %v335
        %v356 = vmin.f32 %v228, %v337
        %v357 = vmin.f32 %v229, %v339
        %v358 = vmin.f32 %v230, %v341
        %v359 = vmin.f32 %v231, %v343
        %360 = vrot.lane.b32.xlu0 %v224, 126
        %v361 = vpop.permute.xlu0 %360
        %362 = vrot.lane.b32.xlu0 %v225, 126
        %v363 = vpop.permute.xlu0 %362
        %364 = vrot.lane.b32.xlu0 %v226, 126
        %v365 = vpop.permute.xlu0 %364
        %366 = vrot.lane.b32.xlu0 %v227, 126
        %v367 = vpop.permute.xlu0 %366
        %368 = vrot.lane.b32.xlu0 %v228, 126
        %v369 = vpop.permute.xlu0 %368
        %370 = vrot.lane.b32.xlu0 %v229, 126
        %v371 = vpop.permute.xlu0 %370
        %372 = vrot.lane.b32.xlu0 %v230, 126
        %v373 = vpop.permute.xlu0 %372
        %374 = vrot.lane.b32.xlu0 %v231, 126
        %v375 = vpop.permute.xlu0 %374
        %v384 = vmin.f32 %v352, %v361
        %v385 = vmin.f32 %v353, %v363
        %v386 = vmin.f32 %v354, %v365
        %v387 = vmin.f32 %v355, %v367
        %v388 = vmin.f32 %v356, %v369
        %v389 = vmin.f32 %v357, %v371
        %v390 = vmin.f32 %v358, %v373
        %v391 = vmin.f32 %v359, %v375
        %400 = vrot.lane.b32.xlu0 %v240, 127
        %v401 = vpop.permute.xlu0 %400
        %402 = vrot.lane.b32.xlu0 %v241, 127
        %v403 = vpop.permute.xlu0 %402
        %404 = vrot.lane.b32.xlu0 %v242, 127
        %v405 = vpop.permute.xlu0 %404
        %406 = vrot.lane.b32.xlu0 %v243, 127
        %v407 = vpop.permute.xlu0 %406
        %408 = vrot.lane.b32.xlu0 %v244, 127
        %v409 = vpop.permute.xlu0 %408
        %410 = vrot.lane.b32.xlu0 %v245, 127
        %v411 = vpop.permute.xlu0 %410
        %412 = vrot.lane.b32.xlu0 %v246, 127
        %v413 = vpop.permute.xlu0 %412
        %414 = vrot.lane.b32.xlu0 %v247, 127
        %v415 = vpop.permute.xlu0 %414
        %v424 = vmin.f32 %v240, %v401
        %v425 = vmin.f32 %v241, %v403
        %v426 = vmin.f32 %v242, %v405
        %v427 = vmin.f32 %v243, %v407
        %v428 = vmin.f32 %v244, %v409
        %v429 = vmin.f32 %v245, %v411
        %v430 = vmin.f32 %v246, %v413
        %v431 = vmin.f32 %v247, %v415
        %v432 = vmax.f32 %v240, %v401
        %v433 = vmax.f32 %v241, %v403
        %v434 = vmax.f32 %v242, %v405
        %v435 = vmax.f32 %v243, %v407
        %v436 = vmax.f32 %v244, %v409
        %v437 = vmax.f32 %v245, %v411
        %v438 = vmax.f32 %v246, %v413
        %v439 = vmax.f32 %v247, %v415
        %440 = vrot.lane.b32.xlu0 %v240, 126
        %v441 = vpop.permute.xlu0 %440
        %442 = vrot.lane.b32.xlu0 %v241, 126
        %v443 = vpop.permute.xlu0 %442
        %444 = vrot.lane.b32.xlu0 %v242, 126
        %v445 = vpop.permute.xlu0 %444
        %446 = vrot.lane.b32.xlu0 %v243, 126
        %v447 = vpop.permute.xlu0 %446
        %448 = vrot.lane.b32.xlu0 %v244, 126
        %v449 = vpop.permute.xlu0 %448
        %450 = vrot.lane.b32.xlu0 %v245, 126
        %v451 = vpop.permute.xlu0 %450
        %452 = vrot.lane.b32.xlu0 %v246, 126
        %v453 = vpop.permute.xlu0 %452
        %454 = vrot.lane.b32.xlu0 %v247, 126
        %v455 = vpop.permute.xlu0 %454
        %v464 = vmin.f32 %v432, %v441
        %v465 = vmin.f32 %v433, %v443
        %v466 = vmin.f32 %v434, %v445
        %v467 = vmin.f32 %v435, %v447
        %v468 = vmin.f32 %v436, %v449
        %v469 = vmin.f32 %v437, %v451
        %v470 = vmin.f32 %v438, %v453
        %v471 = vmin.f32 %v439, %v455
        %v472 = vmax.f32 %v424, %v464
        %v473 = vmax.f32 %v425, %v465
        %v474 = vmax.f32 %v426, %v466
        %v475 = vmax.f32 %v427, %v467
        %v476 = vmax.f32 %v428, %v468
        %v477 = vmax.f32 %v429, %v469
        %v478 = vmax.f32 %v430, %v470
        %v479 = vmax.f32 %v431, %v471
        %v480 = vmin.f32 %v312, %v384
        %v481 = vmin.f32 %v313, %v385
        %v482 = vmin.f32 %v314, %v386
        %v483 = vmin.f32 %v315, %v387
        %v484 = vmin.f32 %v316, %v388
        %v485 = vmin.f32 %v317, %v389
        %v486 = vmin.f32 %v318, %v390
        %v487 = vmin.f32 %v319, %v391
        %v488 = vmax.f32 %v312, %v384
        %v489 = vmax.f32 %v313, %v385
        %v490 = vmax.f32 %v314, %v386
        %v491 = vmax.f32 %v315, %v387
        %v492 = vmax.f32 %v316, %v388
        %v493 = vmax.f32 %v317, %v389
        %v494 = vmax.f32 %v318, %v390
        %v495 = vmax.f32 %v319, %v391
        %v496 = vmin.f32 %v488, %v472
        %v497 = vmin.f32 %v489, %v473
        %v498 = vmin.f32 %v490, %v474
        %v499 = vmin.f32 %v491, %v475
        %v500 = vmin.f32 %v492, %v476
        %v501 = vmin.f32 %v493, %v477
        %v502 = vmin.f32 %v494, %v478
        %v503 = vmin.f32 %v495, %v479
        %v504 = vmax.f32 %v480, %v496
        %v505 = vmax.f32 %v481, %v497
        %v506 = vmax.f32 %v482, %v498
        %v507 = vmax.f32 %v483, %v499
        %v508 = vmax.f32 %v484, %v500
        %v509 = vmax.f32 %v485, %v501
        %v510 = vmax.f32 %v486, %v502
        %v511 = vmax.f32 %v487, %v503
        %vm512 = vcmask 1031168
        %513 = vst.msk [vmem:[%s140] sm:$0xff] %vm512, %v504
        %vm514 = vcmask 1029120
        %515 = vst.msk [vmem:[%s140 + $0x8] sm:$0x3f] %vm514, %v505
        %516 = vst.msk [vmem:[%s140 + $0x10] sm:$0xff] %vm512, %v506
        %517 = vst.msk [vmem:[%s140 + $0x18] sm:$0x3f] %vm514, %v507
        %518 = vst.msk [vmem:[%s140 + $0x20] sm:$0xff] %vm512, %v508
        %519 = vst.msk [vmem:[%s140 + $0x28] sm:$0x3f] %vm514, %v509
        %520 = vst.msk [vmem:[%s140 + $0x30] sm:$0xff] %vm512, %v510
        %521 = vst.msk [vmem:[%s140 + $0x38] sm:$0x3f] %vm514, %v511
        %s522 = smul.u32 4, %s15
        %p523 = scmp.lt.s32.totalorder %s522, 7
        %s524 = scalar_select %p523, %s522, 7
        %s525 = smul.addr %s524, 2
        %s526 = smul.addr %s525, 8
        %s527 = scalar_lea.vmem %s1, %s526
        // Predicated region
        $region29: #{tpu_custom_call.1} parent=23 // pred_check
          %p528 = pneg %p59
        $region30: #{tpu_custom_call.1} parent=23 // pred_check_branch
          %530 = sbr.rel (%p528) target = $region32
        $region31: #{tpu_custom_call.1} parent=23 // pred_region
          %s531 = smul.u32 4, %s15
        $region32: #{tpu_custom_call.1} parent=23 // pred_fallthru
          _
      $region24: #{tpu_custom_call.1} parent=5 // pred_fallthru
        _
      %p532 = scmp.le.s32.totalorder 2, %s10
      // Predicated region
      $region33: #{tpu_custom_call.1} parent=5 // pred_check
        %p533 = pneg %p532
      $region34: #{tpu_custom_call.1} parent=5 // pred_check_branch
        %535 = sbr.rel (%p533) target = $region36
      $region35: #{tpu_custom_call.1} parent=5 // pred_region
        %s536 = ssub.s32 %s10, 2
        // Predicated region
        $region37: #{tpu_custom_call.1} parent=35 // pred_check
          %p537 = pneg %p65
        $region38: #{tpu_custom_call.1} parent=35 // pred_check_branch
          %539 = sbr.rel (%p537) target = $region40
        $region39: #{tpu_custom_call.1} parent=35 // pred_region
          %s540 = smul.u32 4, %s16
          %p541 = scmp.lt.s32.totalorder %s540, 7
          %s542 = scalar_select %p541, %s540, 7
          %s543 = smul.addr %s542, 2
          %s544 = smul.addr %s543, 8
          %s545 = scalar_lea.vmem %s1, %s544
        $region40: #{tpu_custom_call.1} parent=35 // pred_fallthru
          _
      $region36: #{tpu_custom_call.1} parent=5 // pred_fallthru
        _
    $region6: #{tpu_custom_call.1} parent=1 // loop_footer
      %s14 = sadd.s32 1, %s10
    $region7: #{tpu_custom_call.1} parent=1 // loop_footer_branch
      %9 = sbr.rel target = $region3
    $region8: #{tpu_custom_call.1} parent=1 // loop_exit
      _
    %546 = vsyncpa [#allocation3], 1
    %s547 = scalar_lea.sflag [#allocation3], 1
    %548 = vsyncpa %s547, 1

</llo_original>
